<compile_context>
chip_gen: v7x
topology: tpu7x:2x2x1
jax: 0.10.0
libtpu: 0.0.40
codegen_flags: <defaults>
</compile_context>

<pallas_src>
import jax
import jax.numpy as jnp
from jax.experimental import pallas as pl
from jax.experimental.pallas import tpu as pltpu


def _round_up(v, m):
    return ((v + m - 1) // m) * m


def make_resoning_kernel(scales, P, D, H_packed, C_pad):
    """Fused kernel: group sums (all scales) -> ReLU -> ONE Linear1 -> ReLU -> ONE Linear2."""

    def kernel(x_ref, w1_ref, w2_ref, b_ref, out_ref):
        x = x_ref[...]                                            # (Bb, P, D) float32

        # sum_group for every scale: scale-major / group-major, lane-concatenated, then a
        # single leading ReLU (ReLU commutes with the concat).
        parts = []
        for s in scales:
            for g in range(P // s):
                parts.append(jnp.sum(x[:, g * s:(g + 1) * s, :], axis=1))   # (Bb, D)
        seg = jnp.maximum(jnp.concatenate(parts, axis=1), 0.0)              # (Bb, K_total)

        # Linear1 for ALL scales as ONE matmul into disjoint H-lane slots of the packed hidden.
        b1 = b_ref[0:1, 0:H_packed]
        h = jnp.maximum(
            jnp.dot(seg, w1_ref[...], preferred_element_type=jnp.float32) + b1, 0.0)
        # TODO(synk): nn.Dropout(p=0.6) is identity in eval mode; intentionally not modeled.

        # Linear2 for ALL scales as ONE matmul (K = H_packed). 1/n_scales and the summed b2
        # are pre-folded into w2_ref / b_ref row 1 on the host.
        b2 = b_ref[1:2, 0:C_pad]
        out_ref[...] = jnp.dot(h, w2_ref[...], preferred_element_type=jnp.float32) + b2

    return kernel


def prepare_resoning_weights(params, *, P, D, start, max_group):
    """One-time host-side weight packing (hoisted out of the forward path)."""
    scales = list(range(start, max_group + 1))
    n_scales = len(scales)
    assert len(params) == n_scales
    for s in scales:
        assert P % s == 0, "pics (num_segments*num_frames) must be divisible by every scale"

    H = params[0][0].shape[1]
    C = params[0][2].shape[1]
    H_packed = _round_up(n_scales * H, 128)     # all scales share one lane-dense hidden block
    C_pad = _round_up(C, 128)                   # lane-dense output
    BW = max(H_packed, C_pad)
    K_total = sum((P // s) * D for s in scales)
    inv_n = 1.0 / float(n_scales)

    w1_packed = jnp.zeros((K_total, H_packed), jnp.float32)
    w2_scaled = jnp.zeros((H_packed, C_pad), jnp.float32)
    b_cat = jnp.zeros((2, BW), jnp.float32)     # row 0: packed b1, row 1: summed/scaled b2

    k_off = 0
    for i, (s, (w1, b1, w2, b2)) in enumerate(zip(scales, params)):
        k_len = (P // s) * D
        h_off = i * H
        w1_packed = w1_packed.at[k_off:k_off + k_len, h_off:h_off + H].set(w1)
        b_cat = b_cat.at[0, h_off:h_off + H].set(b1[0])
        w2_scaled = w2_scaled.at[h_off:h_off + H, :C].set(w2 * inv_n)   # fold 1/n_scales
        b_cat = b_cat.at[1, :C].add(b2[0] * inv_n)
        k_off += k_len

    meta = dict(scales=tuple(scales), P=P, D=D, H=H, C=C,
                H_packed=H_packed, C_pad=C_pad, K_total=K_total)
    return (w1_packed, w2_scaled, b_cat), meta


def resoning_forward(x, packed, meta):
    """Fused Resoning forward pass as a single Pallas TPU kernel."""
    w1_packed, w2_scaled, b_cat = packed
    P, D = meta["P"], meta["D"]
    C, C_pad, H_packed = meta["C"], meta["C_pad"], meta["H_packed"]
    K_total = meta["K_total"]
    B = x.shape[0]
    assert x.shape == (B, P, D)

    # Batch grid: weights use a constant block index (stay VMEM-resident); batch blocks are
    # "parallel" so both v7x TensorCores are used once batch is realistic.
    block_b = 128 if (B > 128 and B % 128 == 0) else B
    grid = (B // block_b,)

    # Scoped-VMEM request sized to the real footprint (inputs/outputs + headroom for
    # double-buffering and in-kernel temporaries), not the whole per-core VMEM.
    block_bytes = 4 * (block_b * P * D + K_total * H_packed + H_packed * C_pad
                       + b_cat.size + block_b * C_pad)
    vmem_limit = int(min(max(4 * block_bytes, 4 * 1024 * 1024), 32 * 1024 * 1024))

    kernel = make_resoning_kernel(meta["scales"], P, D, H_packed, C_pad)

    out_pad = pl.pallas_call(
        kernel,
        out_shape=jax.ShapeDtypeStruct((B, C_pad), jnp.float32),
        grid_spec=pltpu.PrefetchScalarGridSpec(
            num_scalar_prefetch=0,
            grid=grid,
            in_specs=[
                pl.BlockSpec((block_b, P, D), lambda i: (i, 0, 0)),
                pl.BlockSpec(w1_packed.shape, lambda i: (0, 0)),
                pl.BlockSpec(w2_scaled.shape, lambda i: (0, 0)),
                pl.BlockSpec(b_cat.shape, lambda i: (0, 0)),
            ],
            out_specs=pl.BlockSpec((block_b, C_pad), lambda i: (i, 0)),
        ),
        compiler_params=pltpu.CompilerParams(
            dimension_semantics=("parallel",),
            vmem_limit_bytes=vmem_limit,
        ),
    )(x, w1_packed, w2_scaled, b_cat)

    return out_pad[:, :C]          # strip lane padding outside the kernel (layout plumbing)


def init_params(key, *, num_segments, num_frames, img_dim, num_bottleneck,
                num_class, start, max_group):
    """Deterministic synthetic weights: per-scale (W1[in,H], b1[1,H], W2[H,C], b2[1,C])."""
    P = num_segments * num_frames
    params = []
    for s in range(start, max_group + 1):
        in_dim = img_dim * int(P / s)
        key, k1, k2, k3, k4 = jax.random.split(key, 5)
        w1 = jax.random.normal(k1, (in_dim, num_bottleneck), jnp.float32) / jnp.sqrt(in_dim)
        b1 = jax.random.normal(k2, (1, num_bottleneck), jnp.float32) * 0.01
        w2 = jax.random.normal(k3, (num_bottleneck, num_class), jnp.float32) / jnp.sqrt(num_bottleneck)
        b2 = jax.random.normal(k4, (1, num_class), jnp.float32) * 0.01
        params.append((w1, b1, w2, b2))
    return params


def resoning_ref(x, params, start, max_group):
    """Pure-JAX reference matching the PyTorch forward (eval mode)."""
    B, P, D = x.shape
    C = params[0][2].shape[1]
    pred = jnp.zeros((B, C), jnp.float32)
    for i, s in enumerate(range(start, max_group + 1)):
        ng = P // s
        seg = x.reshape(B, ng, s, D).sum(axis=2).reshape(B, ng * D)   # sum_group
        w1, b1, w2, b2 = params[i]
        h = jnp.maximum(seg, 0.0)
        h = jnp.maximum(h @ w1 + b1, 0.0)
        pred = pred + (h @ w2 + b2)
    return pred / float(max_group - start + 1)


if __name__ == "__main__":
    # Small but module-consistent shapes: pics = num_segments*num_frames = 12 is divisible
    # by every scale in [start, max_group] = [2, 4].
    B = 2
    num_segments, num_frames = 3, 4
    img_dim = 32
    num_bottleneck = 32
    num_class = 101
    start, max_group = 2, 4
    P = num_segments * num_frames

    key = jax.random.PRNGKey(0)
    kx, kp = jax.random.split(key)
    x = jax.random.normal(kx, (B, P, img_dim), jnp.float32)
    params = init_params(kp, num_segments=num_segments, num_frames=num_frames,
                         img_dim=img_dim, num_bottleneck=num_bottleneck,
                         num_class=num_class, start=start, max_group=max_group)

    # One-time weight packing (not on the per-call critical path).
    packed, meta = prepare_resoning_weights(params, P=P, D=img_dim,
                                            start=start, max_group=max_group)
    packed = jax.tree_util.tree_map(jax.block_until_ready, packed)

    out = resoning_forward(x, packed, meta)
    out = jax.block_until_ready(out)

    ref = resoning_ref(x, params, start, max_group)
    assert out.shape == (B, num_class)
    assert jnp.allclose(out, ref, atol=1e-4, rtol=1e-4), "mismatch vs JAX reference"

    print("KERNEL_OK")
</pallas_src>

<mosaic_0001>
module attributes {stable_mosaic.version = 11 : i64} {
  func.func @kernel(%arg0: i32, %arg1: memref<2x12x32xf32, #tpu.memory_space<vmem>>, %arg2: memref<416x128xf32, #tpu.memory_space<vmem>>, %arg3: memref<128x128xf32, #tpu.memory_space<vmem>>, %arg4: memref<2x128xf32, #tpu.memory_space<vmem>>, %arg5: memref<2x128xf32, #tpu.memory_space<vmem>>) attributes {dimension_semantics = [#tpu.dimension_semantics<parallel>], iteration_bounds = array<i64: 1>, scalar_prefetch = 0 : i64, scratch_operands = 0 : i64, tpu.core_type = #tpu.core_type<tc>, window_params = [{transform_indices = @transform_0, window_bounds = array<i64: 2, 12, 32>}, {pipeline_mode = #tpu.pipeline_mode<synchronous>, transform_indices = @transform_1, window_bounds = array<i64: 416, 128>}, {pipeline_mode = #tpu.pipeline_mode<synchronous>, transform_indices = @transform_2, window_bounds = array<i64: 128, 128>}, {pipeline_mode = #tpu.pipeline_mode<synchronous>, transform_indices = @transform_3, window_bounds = array<i64: 2, 128>}, {transform_indices = @transform_4, window_bounds = array<i64: 2, 128>}]} {
    %c0 = arith.constant 0 : index
    %c0_0 = arith.constant 0 : index
    %c0_1 = arith.constant 0 : index
    %0 = vector.load %arg1[%c0, %c0_0, %c0_1] : memref<2x12x32xf32, #tpu.memory_space<vmem>>, vector<2x12x32xf32>
    %1 = vector.extract_strided_slice %0 {offsets = [0, 0, 0], sizes = [2, 2, 32], strides = [1, 1, 1]} : vector<2x12x32xf32> to vector<2x2x32xf32>
    %cst = arith.constant dense<0.000000e+00> : vector<2x32xf32>
    %2 = vector.multi_reduction <add>, %1, %cst [1] : vector<2x2x32xf32> to vector<2x32xf32>
    %3 = vector.extract_strided_slice %0 {offsets = [0, 2, 0], sizes = [2, 2, 32], strides = [1, 1, 1]} : vector<2x12x32xf32> to vector<2x2x32xf32>
    %cst_2 = arith.constant dense<0.000000e+00> : vector<2x32xf32>
    %4 = vector.multi_reduction <add>, %3, %cst_2 [1] : vector<2x2x32xf32> to vector<2x32xf32>
    %5 = vector.extract_strided_slice %0 {offsets = [0, 4, 0], sizes = [2, 2, 32], strides = [1, 1, 1]} : vector<2x12x32xf32> to vector<2x2x32xf32>
    %cst_3 = arith.constant dense<0.000000e+00> : vector<2x32xf32>
    %6 = vector.multi_reduction <add>, %5, %cst_3 [1] : vector<2x2x32xf32> to vector<2x32xf32>
    %7 = vector.extract_strided_slice %0 {offsets = [0, 6, 0], sizes = [2, 2, 32], strides = [1, 1, 1]} : vector<2x12x32xf32> to vector<2x2x32xf32>
    %cst_4 = arith.constant dense<0.000000e+00> : vector<2x32xf32>
    %8 = vector.multi_reduction <add>, %7, %cst_4 [1] : vector<2x2x32xf32> to vector<2x32xf32>
    %9 = vector.extract_strided_slice %0 {offsets = [0, 8, 0], sizes = [2, 2, 32], strides = [1, 1, 1]} : vector<2x12x32xf32> to vector<2x2x32xf32>
    %cst_5 = arith.constant dense<0.000000e+00> : vector<2x32xf32>
    %10 = vector.multi_reduction <add>, %9, %cst_5 [1] : vector<2x2x32xf32> to vector<2x32xf32>
    %11 = vector.extract_strided_slice %0 {offsets = [0, 10, 0], sizes = [2, 2, 32], strides = [1, 1, 1]} : vector<2x12x32xf32> to vector<2x2x32xf32>
    %cst_6 = arith.constant dense<0.000000e+00> : vector<2x32xf32>
    %12 = vector.multi_reduction <add>, %11, %cst_6 [1] : vector<2x2x32xf32> to vector<2x32xf32>
    %13 = vector.extract_strided_slice %0 {offsets = [0, 0, 0], sizes = [2, 3, 32], strides = [1, 1, 1]} : vector<2x12x32xf32> to vector<2x3x32xf32>
    %cst_7 = arith.constant dense<0.000000e+00> : vector<2x32xf32>
    %14 = vector.multi_reduction <add>, %13, %cst_7 [1] : vector<2x3x32xf32> to vector<2x32xf32>
    %15 = vector.extract_strided_slice %0 {offsets = [0, 3, 0], sizes = [2, 3, 32], strides = [1, 1, 1]} : vector<2x12x32xf32> to vector<2x3x32xf32>
    %cst_8 = arith.constant dense<0.000000e+00> : vector<2x32xf32>
    %16 = vector.multi_reduction <add>, %15, %cst_8 [1] : vector<2x3x32xf32> to vector<2x32xf32>
    %17 = vector.extract_strided_slice %0 {offsets = [0, 6, 0], sizes = [2, 3, 32], strides = [1, 1, 1]} : vector<2x12x32xf32> to vector<2x3x32xf32>
    %cst_9 = arith.constant dense<0.000000e+00> : vector<2x32xf32>
    %18 = vector.multi_reduction <add>, %17, %cst_9 [1] : vector<2x3x32xf32> to vector<2x32xf32>
    %19 = vector.extract_strided_slice %0 {offsets = [0, 9, 0], sizes = [2, 3, 32], strides = [1, 1, 1]} : vector<2x12x32xf32> to vector<2x3x32xf32>
    %cst_10 = arith.constant dense<0.000000e+00> : vector<2x32xf32>
    %20 = vector.multi_reduction <add>, %19, %cst_10 [1] : vector<2x3x32xf32> to vector<2x32xf32>
    %21 = vector.extract_strided_slice %0 {offsets = [0, 0, 0], sizes = [2, 4, 32], strides = [1, 1, 1]} : vector<2x12x32xf32> to vector<2x4x32xf32>
    %cst_11 = arith.constant dense<0.000000e+00> : vector<2x32xf32>
    %22 = vector.multi_reduction <add>, %21, %cst_11 [1] : vector<2x4x32xf32> to vector<2x32xf32>
    %23 = vector.extract_strided_slice %0 {offsets = [0, 4, 0], sizes = [2, 4, 32], strides = [1, 1, 1]} : vector<2x12x32xf32> to vector<2x4x32xf32>
    %cst_12 = arith.constant dense<0.000000e+00> : vector<2x32xf32>
    %24 = vector.multi_reduction <add>, %23, %cst_12 [1] : vector<2x4x32xf32> to vector<2x32xf32>
    %25 = vector.extract_strided_slice %0 {offsets = [0, 8, 0], sizes = [2, 4, 32], strides = [1, 1, 1]} : vector<2x12x32xf32> to vector<2x4x32xf32>
    %cst_13 = arith.constant dense<0.000000e+00> : vector<2x32xf32>
    %26 = vector.multi_reduction <add>, %25, %cst_13 [1] : vector<2x4x32xf32> to vector<2x32xf32>
    %27 = tpu.concatenate %2, %4, %6, %8, %10, %12, %14, %16, %18, %20, %22, %24, %26 in 1 : vector<2x32xf32>, vector<2x32xf32>, vector<2x32xf32>, vector<2x32xf32>, vector<2x32xf32>, vector<2x32xf32>, vector<2x32xf32>, vector<2x32xf32>, vector<2x32xf32>, vector<2x32xf32>, vector<2x32xf32>, vector<2x32xf32>, vector<2x32xf32> -> vector<2x416xf32>
    %cst_14 = arith.constant 0.000000e+00 : f32
    %28 = vector.broadcast %cst_14 : f32 to vector<2x416xf32>
    %29 = arith.maximumf %27, %28 : vector<2x416xf32>
    %c0_15 = arith.constant 0 : index
    %c0_16 = arith.constant 0 : index
    %30 = vector.load %arg4[%c0_15, %c0_16] : memref<2x128xf32, #tpu.memory_space<vmem>>, vector<1x128xf32>
    %c0_17 = arith.constant 0 : index
    %c0_18 = arith.constant 0 : index
    %31 = vector.load %arg2[%c0_17, %c0_18] : memref<416x128xf32, #tpu.memory_space<vmem>>, vector<416x128xf32>
    %cst_19 = arith.constant dense<0.000000e+00> : vector<2x128xf32>
    %32 = tpu.matmul %29, %31, %cst_19 {dimension_numbers = #tpu.dot_dimension_numbers<[1], [0], [0], [1], [0, 0, 1, 1], [], []>} : vector<2x416xf32>, vector<416x128xf32>, vector<2x128xf32> -> vector<2x128xf32>
    %33 = vector.broadcast %30 : vector<1x128xf32> to vector<2x128xf32>
    %34 = arith.addf %32, %33 : vector<2x128xf32>
    %cst_20 = arith.constant 0.000000e+00 : f32
    %35 = vector.broadcast %cst_20 : f32 to vector<2x128xf32>
    %36 = arith.maximumf %34, %35 : vector<2x128xf32>
    %c1 = arith.constant 1 : index
    %c0_21 = arith.constant 0 : index
    %37 = vector.load %arg4[%c1, %c0_21] : memref<2x128xf32, #tpu.memory_space<vmem>>, vector<1x128xf32>
    %c0_22 = arith.constant 0 : index
    %c0_23 = arith.constant 0 : index
    %38 = vector.load %arg3[%c0_22, %c0_23] : memref<128x128xf32, #tpu.memory_space<vmem>>, vector<128x128xf32>
    %cst_24 = arith.constant dense<0.000000e+00> : vector<2x128xf32>
    %39 = tpu.matmul %36, %38, %cst_24 {dimension_numbers = #tpu.dot_dimension_numbers<[1], [0], [0], [1], [0, 0, 1, 1], [], []>} : vector<2x128xf32>, vector<128x128xf32>, vector<2x128xf32> -> vector<2x128xf32>
    %40 = vector.broadcast %37 : vector<1x128xf32> to vector<2x128xf32>
    %41 = arith.addf %39, %40 : vector<2x128xf32>
    %c0_25 = arith.constant 0 : index
    %c0_26 = arith.constant 0 : index
    %42 = vector.load %arg5[%c0_25, %c0_26] : memref<2x128xf32, #tpu.memory_space<vmem>>, vector<2x128xf32>
    tpu.vector_store %arg5[%c0_25, %c0_26], %41 {strides = array<i32>} : memref<2x128xf32, #tpu.memory_space<vmem>>, vector<2x128xf32>,
    return
  }
  func.func @transform_0(%arg0: i32) -> (i32, i32, i32) {
    %c0_i32 = arith.constant 0 : i32
    %c0_i32_0 = arith.constant 0 : i32
    %c0_i32_1 = arith.constant 0 : i32
    return %arg0, %c0_i32, %c0_i32_0 : i32, i32, i32
  }
  func.func @transform_1(%arg0: i32) -> (i32, i32) {
    %c0_i32 = arith.constant 0 : i32
    %c0_i32_0 = arith.constant 0 : i32
    %c0_i32_1 = arith.constant 0 : i32
    return %c0_i32, %c0_i32_0 : i32, i32
  }
  func.func @transform_2(%arg0: i32) -> (i32, i32) {
    %c0_i32 = arith.constant 0 : i32
    %c0_i32_0 = arith.constant 0 : i32
    %c0_i32_1 = arith.constant 0 : i32
    return %c0_i32, %c0_i32_0 : i32, i32
  }
  func.func @transform_3(%arg0: i32) -> (i32, i32) {
    %c0_i32 = arith.constant 0 : i32
    %c0_i32_0 = arith.constant 0 : i32
    %c0_i32_1 = arith.constant 0 : i32
    return %c0_i32, %c0_i32_0 : i32, i32
  }
  func.func @transform_4(%arg0: i32) -> (i32, i32) {
    %c0_i32 = arith.constant 0 : i32
    %c0_i32_0 = arith.constant 0 : i32
    return %arg0, %c0_i32 : i32, i32
  }
}

</mosaic_0001>

<llo_original>
// kernel: tpu_custom_call.1
$region0: #{tpu_custom_call.1}
  #allocation0 [shape = 'u32[]', space=smem, size = 0x4, offset = 0x4, fixed_abs, tag = 'smem constant byte address 0x4 - core index']
  #allocation1 [shape = 'u32[144,128]{1,0:T(1,128)}', space=vmem, size = 0x12000, scoped, tag = 'internal scratch']
  %s0 = inlined_call_operand.vmem [shape: f32[2,12,32], index: 0, kind: input, shape index: {}]
  %s1 = inlined_call_operand.hbm [shape: f32[416,128], index: 1, kind: input, shape index: {}]
  %s2 = inlined_call_operand.hbm [shape: f32[128,128], index: 2, kind: input, shape index: {}]
  %s3 = inlined_call_operand.vmem [shape: f32[2,128], index: 3, kind: input, shape index: {}]
  %s4 = inlined_call_operand.hbm [shape: f32[2,128], index: 4, kind: output, shape index: {}]
  %s5 = sld [smem:[#allocation0]]
  $region34: #{tpu_custom_call.1} parent=0
    _
  %s7 = ssub.s32 1, %s5
  %s8 = scalar_select 0, %s7, %s5
  $region1: #{tpu_custom_call.1} parent=0
    #allocation2 [shape = 'u8[212992]{0}', space=vmem, size = 0x34000, scoped, tag = 'input window, operand 1, single buffered']
    #allocation3 [shape = 's32[1]{0}', space=sflag, size = 0x4, scoped, tag = 'scoped memory for tpu_custom_call.1']
    #allocation4 [shape = 's32[1]{0}', space=sflag, size = 0x4, scoped, tag = 'scoped memory for tpu_custom_call.1']
    #allocation5 [shape = 'u8[65536]{0}', space=vmem, size = 0x10000, scoped, tag = 'input window, operand 2, single buffered']
    #allocation6 [shape = 's32[1]{0}', space=sflag, size = 0x4, scoped, tag = 'scoped memory for tpu_custom_call.1']
    #allocation7 [shape = 'u8[1024]{0}', space=vmem, size = 0x400, scoped, tag = 'output window, operand 0, single buffered']
    %9 = vsyncpa [#allocation3], 0
    %10 = vsyncpa [#allocation6], 0
    %11 = vsyncpa [#allocation4], 0
    // Predicated region
    $region2: #{tpu_custom_call.1} parent=1 // pred_check
      _
    $region3: #{tpu_custom_call.1} parent=1 // pred_check_branch
      %13 = sbr.rel (0) target = $region5
    $region4: #{tpu_custom_call.1} parent=1 // pred_region
      _
    $region5: #{tpu_custom_call.1} parent=1 // pred_fallthru
      _
    // Predicated region
    $region6: #{tpu_custom_call.1} parent=1 // pred_check
      _
    $region7: #{tpu_custom_call.1} parent=1 // pred_check_branch
      %15 = sbr.rel (0) target = $region9
    $region8: #{tpu_custom_call.1} parent=1 // pred_region
      %s17 = ssub.s32 6656, 6656
      %18 = vsyncadd [#allocation3], %s17
      %s19 = sshll.u32 [#allocation2], 4
      %s20 = int_to_ptr.vmem [resolvable:$true] %s19
      %25 = dma.hbm_to_vmem [thread:$0]  %s1, 6656, %s20, [#allocation3], 128, 128, 8
    $region9: #{tpu_custom_call.1} parent=1 // pred_fallthru
      _
    // Predicated region
    $region10: #{tpu_custom_call.1} parent=1 // pred_check
      _
    $region11: #{tpu_custom_call.1} parent=1 // pred_check_branch
      %27 = sbr.rel (0) target = $region13
    $region12: #{tpu_custom_call.1} parent=1 // pred_region
      %s29 = ssub.s32 2048, 2048
      %30 = vsyncadd [#allocation6], %s29
      %s31 = sshll.u32 [#allocation5], 4
      %s32 = int_to_ptr.vmem [resolvable:$true] %s31
      %37 = dma.hbm_to_vmem [thread:$0]  %s2, 2048, %s32, [#allocation6], 128, 128, 8
    $region13: #{tpu_custom_call.1} parent=1 // pred_fallthru
      _
    // Predicated region
    $region14: #{tpu_custom_call.1} parent=1 // pred_check
      _
    $region15: #{tpu_custom_call.1} parent=1 // pred_check_branch
      %39 = sbr.rel (0) target = $region17
    $region16: #{tpu_custom_call.1} parent=1 // pred_region
      _
    $region17: #{tpu_custom_call.1} parent=1 // pred_fallthru
      _
    // Predicated region
    $region18: #{tpu_custom_call.1} parent=1 // pred_check
      _
    $region19: #{tpu_custom_call.1} parent=1 // pred_check_branch
      %41 = sbr.rel (0) target = $region21
    $region20: #{tpu_custom_call.1} parent=1 // pred_region
      %42 = dma.done [#allocation3], 6656
    $region21: #{tpu_custom_call.1} parent=1 // pred_fallthru
      _
    // Predicated region
    $region22: #{tpu_custom_call.1} parent=1 // pred_check
      _
    $region23: #{tpu_custom_call.1} parent=1 // pred_check_branch
      %44 = sbr.rel (0) target = $region25
    $region24: #{tpu_custom_call.1} parent=1 // pred_region
      %45 = dma.done [#allocation6], 2048
    $region25: #{tpu_custom_call.1} parent=1 // pred_fallthru
      _
    %v46 = vld [vmem:[%s0] sm:$0xff]
    %v47 = vld [vmem:[%s0 + $0x8] sm:$0xf]
    %v48 = vld [vmem:[%s0 + $0x10] sm:$0xff]
    %v49 = vld [vmem:[%s0 + $0x18] sm:$0xf]
    %vm50 = vcmask 254976
    %v51 = vsel %vm50, %v46, 0.0
    %v52 = vrot.slane %v51, 4
    %v53 = vadd.f32 %v51, %v52
    %v54 = vrot.slane %v53, 2
    %v55 = vadd.f32 %v53, %v54
    %v56 = vrot.slane %v55, 1
    %v57 = vadd.f32 %v55, %v56
    %v58 = vsel %vm50, %v48, 0.0
    %v59 = vrot.slane %v58, 4
    %v60 = vadd.f32 %v58, %v59
    %v61 = vrot.slane %v60, 2
    %v62 = vadd.f32 %v60, %v61
    %v63 = vrot.slane %v62, 1
    %v64 = vadd.f32 %v62, %v63
    %v67 = vrot.slane %v46, 2
    %v68 = vrot.slane %v48, 2
    %v71 = vsel %vm50, %v67, 0.0
    %v72 = vrot.slane %v71, 4
    %v73 = vadd.f32 %v71, %v72
    %v74 = vrot.slane %v73, 2
    %v75 = vadd.f32 %v73, %v74
    %v76 = vrot.slane %v75, 1
    %v77 = vadd.f32 %v75, %v76
    %v78 = vsel %vm50, %v68, 0.0
    %v79 = vrot.slane %v78, 4
    %v80 = vadd.f32 %v78, %v79
    %v81 = vrot.slane %v80, 2
    %v82 = vadd.f32 %v80, %v81
    %v83 = vrot.slane %v82, 1
    %v84 = vadd.f32 %v82, %v83
    %v85 = vrot.slane %v46, 4
    %v86 = vrot.slane %v48, 4
    %v89 = vsel %vm50, %v85, 0.0
    %v90 = vrot.slane %v89, 4
    %v91 = vadd.f32 %v89, %v90
    %v92 = vrot.slane %v91, 2
    %v93 = vadd.f32 %v91, %v92
    %v94 = vrot.slane %v93, 1
    %v95 = vadd.f32 %v93, %v94
    %v96 = vsel %vm50, %v86, 0.0
    %v97 = vrot.slane %v96, 4
    %v98 = vadd.f32 %v96, %v97
    %v99 = vrot.slane %v98, 2
    %v100 = vadd.f32 %v98, %v99
    %v101 = vrot.slane %v100, 1
    %v102 = vadd.f32 %v100, %v101
    %v103 = vrot.slane %v46, 6
    %v104 = vrot.slane %v48, 6
    %v107 = vsel %vm50, %v103, 0.0
    %v108 = vrot.slane %v107, 4
    %v109 = vadd.f32 %v107, %v108
    %v110 = vrot.slane %v109, 2
    %v111 = vadd.f32 %v109, %v110
    %v112 = vrot.slane %v111, 1
    %v113 = vadd.f32 %v111, %v112
    %v114 = vsel %vm50, %v104, 0.0
    %v115 = vrot.slane %v114, 4
    %v116 = vadd.f32 %v114, %v115
    %v117 = vrot.slane %v116, 2
    %v118 = vadd.f32 %v116, %v117
    %v119 = vrot.slane %v118, 1
    %v120 = vadd.f32 %v118, %v119
    %v121 = vsel %vm50, %v47, 0.0
    %v122 = vrot.slane %v121, 4
    %v123 = vadd.f32 %v121, %v122
    %v124 = vrot.slane %v123, 2
    %v125 = vadd.f32 %v123, %v124
    %v126 = vrot.slane %v125, 1
    %v127 = vadd.f32 %v125, %v126
    %v128 = vsel %vm50, %v49, 0.0
    %v129 = vrot.slane %v128, 4
    %v130 = vadd.f32 %v128, %v129
    %v131 = vrot.slane %v130, 2
    %v132 = vadd.f32 %v130, %v131
    %v133 = vrot.slane %v132, 1
    %v134 = vadd.f32 %v132, %v133
    %v137 = vrot.slane %v47, 2
    %v138 = vrot.slane %v49, 2
    %v141 = vsel %vm50, %v137, 0.0
    %v142 = vrot.slane %v141, 4
    %v143 = vadd.f32 %v141, %v142
    %v144 = vrot.slane %v143, 2
    %v145 = vadd.f32 %v143, %v144
    %v146 = vrot.slane %v145, 1
    %v147 = vadd.f32 %v145, %v146
    %v148 = vsel %vm50, %v138, 0.0
    %v149 = vrot.slane %v148, 4
    %v150 = vadd.f32 %v148, %v149
    %v151 = vrot.slane %v150, 2
    %v152 = vadd.f32 %v150, %v151
    %v153 = vrot.slane %v152, 1
    %v154 = vadd.f32 %v152, %v153
    %vm155 = vcmask 256000
    %v156 = vsel %vm155, %v46, 0.0
    %v157 = vrot.slane %v156, 4
    %v158 = vadd.f32 %v156, %v157
    %v159 = vrot.slane %v158, 2
    %v160 = vadd.f32 %v158, %v159
    %v161 = vrot.slane %v160, 1
    %v162 = vadd.f32 %v160, %v161
    %v163 = vsel %vm155, %v48, 0.0
    %v164 = vrot.slane %v163, 4
    %v165 = vadd.f32 %v163, %v164
    %v166 = vrot.slane %v165, 2
    %v167 = vadd.f32 %v165, %v166
    %v168 = vrot.slane %v167, 1
    %v169 = vadd.f32 %v167, %v168
    %v170 = vrot.slane %v46, 3
    %v171 = vrot.slane %v48, 3
    %v174 = vsel %vm155, %v170, 0.0
    %v175 = vrot.slane %v174, 4
    %v176 = vadd.f32 %v174, %v175
    %v177 = vrot.slane %v176, 2
    %v178 = vadd.f32 %v176, %v177
    %v179 = vrot.slane %v178, 1
    %v180 = vadd.f32 %v178, %v179
    %v181 = vsel %vm155, %v171, 0.0
    %v182 = vrot.slane %v181, 4
    %v183 = vadd.f32 %v181, %v182
    %v184 = vrot.slane %v183, 2
    %v185 = vadd.f32 %v183, %v184
    %v186 = vrot.slane %v185, 1
    %v187 = vadd.f32 %v185, %v186
    %vm188 = vcmask 1041408
    %v189 = vrot.slane %v47, 6
    %v190 = vsel %vm188, %v103, %v189
    %v191 = vrot.slane %v49, 6
    %v192 = vsel %vm188, %v104, %v191
    %v195 = vsel %vm155, %v190, 0.0
    %v196 = vrot.slane %v195, 4
    %v197 = vadd.f32 %v195, %v196
    %v198 = vrot.slane %v197, 2
    %v199 = vadd.f32 %v197, %v198
    %v200 = vrot.slane %v199, 1
    %v201 = vadd.f32 %v199, %v200
    %v202 = vsel %vm155, %v192, 0.0
    %v203 = vrot.slane %v202, 4
    %v204 = vadd.f32 %v202, %v203
    %v205 = vrot.slane %v204, 2
    %v206 = vadd.f32 %v204, %v205
    %v207 = vrot.slane %v206, 1
    %v208 = vadd.f32 %v206, %v207
    %v209 = vrot.slane %v47, 1
    %v210 = vrot.slane %v49, 1
    %v213 = vsel %vm155, %v209, 0.0
    %v214 = vrot.slane %v213, 4
    %v215 = vadd.f32 %v213, %v214
    %v216 = vrot.slane %v215, 2
    %v217 = vadd.f32 %v215, %v216
    %v218 = vrot.slane %v217, 1
    %v219 = vadd.f32 %v217, %v218
    %v220 = vsel %vm155, %v210, 0.0
    %v221 = vrot.slane %v220, 4
    %v222 = vadd.f32 %v220, %v221
    %v223 = vrot.slane %v222, 2
    %v224 = vadd.f32 %v222, %v223
    %v225 = vrot.slane %v224, 1
    %v226 = vadd.f32 %v224, %v225
    %vm227 = vcmask 257024
    %v228 = vsel %vm227, %v46, 0.0
    %v229 = vrot.slane %v228, 4
    %v230 = vadd.f32 %v228, %v229
    %v231 = vrot.slane %v230, 2
    %v232 = vadd.f32 %v230, %v231
    %v233 = vrot.slane %v232, 1
    %v234 = vadd.f32 %v232, %v233
    %v235 = vsel %vm227, %v48, 0.0
    %v236 = vrot.slane %v235, 4
    %v237 = vadd.f32 %v235, %v236
    %v238 = vrot.slane %v237, 2
    %v239 = vadd.f32 %v237, %v238
    %v240 = vrot.slane %v239, 1
    %v241 = vadd.f32 %v239, %v240
    %v242 = vsel %vm227, %v85, 0.0
    %v243 = vrot.slane %v242, 4
    %v244 = vadd.f32 %v242, %v243
    %v245 = vrot.slane %v244, 2
    %v246 = vadd.f32 %v244, %v245
    %v247 = vrot.slane %v246, 1
    %v248 = vadd.f32 %v246, %v247
    %v249 = vsel %vm227, %v86, 0.0
    %v250 = vrot.slane %v249, 4
    %v251 = vadd.f32 %v249, %v250
    %v252 = vrot.slane %v251, 2
    %v253 = vadd.f32 %v251, %v252
    %v254 = vrot.slane %v253, 1
    %v255 = vadd.f32 %v253, %v254
    %v256 = vsel %vm227, %v47, 0.0
    %v257 = vrot.slane %v256, 4
    %v258 = vadd.f32 %v256, %v257
    %v259 = vrot.slane %v258, 2
    %v260 = vadd.f32 %v258, %v259
    %v261 = vrot.slane %v260, 1
    %v262 = vadd.f32 %v260, %v261
    %v263 = vsel %vm227, %v49, 0.0
    %v264 = vrot.slane %v263, 4
    %v265 = vadd.f32 %v263, %v264
    %v266 = vrot.slane %v265, 2
    %v267 = vadd.f32 %v265, %v266
    %v268 = vrot.slane %v267, 1
    %v269 = vadd.f32 %v267, %v268
    %vm272 = vcmask 1041409
    %v273 = vsel %vm272, %v64, %v57
    %v277 = vsel %vm272, %v84, %v77
    %278 = vrot.lane.b32.xlu0 %v277, 32
    %v279 = vpop.permute.xlu0 %278
    %v283 = vsel %vm272, %v102, %v95
    %284 = vrot.lane.b32.xlu0 %v283, 64
    %v285 = vpop.permute.xlu0 %284
    %v289 = vsel %vm272, %v120, %v113
    %290 = vrot.lane.b32.xlu0 %v289, 96
    %v291 = vpop.permute.xlu0 %290
    %v295 = vsel %vm272, %v134, %v127
    %v299 = vsel %vm272, %v154, %v147
    %300 = vrot.lane.b32.xlu0 %v299, 32
    %v301 = vpop.permute.xlu0 %300
    %v305 = vsel %vm272, %v169, %v162
    %306 = vrot.lane.b32.xlu0 %v305, 64
    %v307 = vpop.permute.xlu0 %306
    %v311 = vsel %vm272, %v187, %v180
    %312 = vrot.lane.b32.xlu0 %v311, 96
    %v313 = vpop.permute.xlu0 %312
    %v317 = vsel %vm272, %v208, %v201
    %v321 = vsel %vm272, %v226, %v219
    %322 = vrot.lane.b32.xlu0 %v321, 32
    %v323 = vpop.permute.xlu0 %322
    %v327 = vsel %vm272, %v241, %v234
    %328 = vrot.lane.b32.xlu0 %v327, 64
    %v329 = vpop.permute.xlu0 %328
    %v333 = vsel %vm272, %v255, %v248
    %334 = vrot.lane.b32.xlu0 %v333, 96
    %v335 = vpop.permute.xlu0 %334
    %v339 = vsel %vm272, %v269, %v262
    %vm341 = vcmask 261120
    %v342 = vsel %vm341, %v273, %v279
    %vm343 = vcmask 523264
    %v344 = vsel %vm343, %v342, %v285
    %vm345 = vcmask 785408
    %v346 = vsel %vm345, %v344, %v291
    %v347 = vsel %vm341, %v295, %v301
    %v348 = vsel %vm343, %v347, %v307
    %v349 = vsel %vm345, %v348, %v313
    %v350 = vsel %vm341, %v317, %v323
    %v351 = vsel %vm343, %v350, %v329
    %v352 = vsel %vm345, %v351, %v335
    %v353 = vmax.f32 %v346, 0.0
    %v354 = vmax.f32 %v349, 0.0
    %v355 = vmax.f32 %v352, 0.0
    %v356 = vmax.f32 %v339, 0.0
    %v357 = vld [vmem:[%s3] sm:$0x1]
    %v358 = vld [vmem:[#allocation2] sm:$0xff]
    %v359 = vld [vmem:[#allocation2 + $0x8] sm:$0xff]
    %v360 = vld [vmem:[#allocation2 + $0x10] sm:$0xff]
    %v361 = vld [vmem:[#allocation2 + $0x18] sm:$0xff]
    %v362 = vld [vmem:[#allocation2 + $0x20] sm:$0xff]
    %v363 = vld [vmem:[#allocation2 + $0x28] sm:$0xff]
    %v364 = vld [vmem:[#allocation2 + $0x30] sm:$0xff]
    %v365 = vld [vmem:[#allocation2 + $0x38] sm:$0xff]
    %v366 = vld [vmem:[#allocation2 + $0x40] sm:$0xff]
    %v367 = vld [vmem:[#allocation2 + $0x48] sm:$0xff]
    %v368 = vld [vmem:[#allocation2 + $0x50] sm:$0xff]
    %v369 = vld [vmem:[#allocation2 + $0x58] sm:$0xff]
    %v370 = vld [vmem:[#allocation2 + $0x60] sm:$0xff]
    %v371 = vld [vmem:[#allocation2 + $0x68] sm:$0xff]
    %v372 = vld [vmem:[#allocation2 + $0x70] sm:$0xff]
    %v373 = vld [vmem:[#allocation2 + $0x78] sm:$0xff]
    %v374 = vld [vmem:[#allocation2 + $0x80] sm:$0xff]
    %v375 = vld [vmem:[#allocation2 + $0x88] sm:$0xff]
    %v376 = vld [vmem:[#allocation2 + $0x90] sm:$0xff]
    %v377 = vld [vmem:[#allocation2 + $0x98] sm:$0xff]
    %v378 = vld [vmem:[#allocation2 + $0xa0] sm:$0xff]
    %v379 = vld [vmem:[#allocation2 + $0xa8] sm:$0xff]
    %v380 = vld [vmem:[#allocation2 + $0xb0] sm:$0xff]
    %v381 = vld [vmem:[#allocation2 + $0xb8] sm:$0xff]
    %v382 = vld [vmem:[#allocation2 + $0xc0] sm:$0xff]
    %v383 = vld [vmem:[#allocation2 + $0xc8] sm:$0xff]
    %v384 = vld [vmem:[#allocation2 + $0xd0] sm:$0xff]
    %v385 = vld [vmem:[#allocation2 + $0xd8] sm:$0xff]
    %v386 = vld [vmem:[#allocation2 + $0xe0] sm:$0xff]
    %v387 = vld [vmem:[#allocation2 + $0xe8] sm:$0xff]
    %v388 = vld [vmem:[#allocation2 + $0xf0] sm:$0xff]
    %v389 = vld [vmem:[#allocation2 + $0xf8] sm:$0xff]
    %v390 = vld [vmem:[#allocation2 + $0x100] sm:$0xff]
    %v391 = vld [vmem:[#allocation2 + $0x108] sm:$0xff]
    %v392 = vld [vmem:[#allocation2 + $0x110] sm:$0xff]
    %v393 = vld [vmem:[#allocation2 + $0x118] sm:$0xff]
    %v394 = vld [vmem:[#allocation2 + $0x120] sm:$0xff]
    %v395 = vld [vmem:[#allocation2 + $0x128] sm:$0xff]
    %v396 = vld [vmem:[#allocation2 + $0x130] sm:$0xff]
    %v397 = vld [vmem:[#allocation2 + $0x138] sm:$0xff]
    %v398 = vld [vmem:[#allocation2 + $0x140] sm:$0xff]
    %v399 = vld [vmem:[#allocation2 + $0x148] sm:$0xff]
    %v400 = vld [vmem:[#allocation2 + $0x150] sm:$0xff]
    %v401 = vld [vmem:[#allocation2 + $0x158] sm:$0xff]
    %v402 = vld [vmem:[#allocation2 + $0x160] sm:$0xff]
    %v403 = vld [vmem:[#allocation2 + $0x168] sm:$0xff]
    %v404 = vld [vmem:[#allocation2 + $0x170] sm:$0xff]
    %v405 = vld [vmem:[#allocation2 + $0x178] sm:$0xff]
    %v406 = vld [vmem:[#allocation2 + $0x180] sm:$0xff]
    %v407 = vld [vmem:[#allocation2 + $0x188] sm:$0xff]
    %v408 = vld [vmem:[#allocation2 + $0x190] sm:$0xff]
    %v409 = vld [vmem:[#allocation2 + $0x198] sm:$0xff]
    %v410 = vlaneseq
    %v411 = vshrl.u32 %v410, 7
    %v412 = vsub.s32 0, %v411
    %v413 = vrot.slane %v357, %v412
    %v415 = vsel %vm341, %v356, 0
    %417 = vmatprep.subr.mxu0 0.0
    %418 = vmatpush1.msra.mxu0 %v358
    %419 = vmatprep.subr.mxu0 0.0
    %420 = vmatpush1.msra.mxu0 %v359
    %421 = vmatprep.subr.mxu0 0.0
    %422 = vmatpush1.msra.mxu0 %v360
    %423 = vmatprep.subr.mxu0 0.0
    %424 = vmatpush1.msra.mxu0 %v361
    %425 = vmatprep.subr.mxu0 0.0
    %426 = vmatpush1.msra.mxu0 %v362
    %427 = vmatprep.subr.mxu0 0.0
    %428 = vmatpush1.msra.mxu0 %v363
    %429 = vmatprep.subr.mxu0 0.0
    %430 = vmatpush1.msra.mxu0 %v364
    %431 = vmatprep.subr.mxu0 0.0
    %432 = vmatpush1.msra.mxu0 %v365
    %433 = vmatprep.subr.mxu0 0.0
    %434 = vmatpush1.msra.mxu0 %v366
    %435 = vmatprep.subr.mxu0 0.0
    %436 = vmatpush1.msra.mxu0 %v367
    %437 = vmatprep.subr.mxu0 0.0
    %438 = vmatpush1.msra.mxu0 %v368
    %439 = vmatprep.subr.mxu0 0.0
    %440 = vmatpush1.msra.mxu0 %v369
    %441 = vmatprep.subr.mxu0 0.0
    %442 = vmatpush1.msra.mxu0 %v370
    %443 = vmatprep.subr.mxu0 0.0
    %444 = vmatpush1.msra.mxu0 %v371
    %445 = vmatprep.subr.mxu0 0.0
    %446 = vmatpush1.msra.mxu0 %v372
    %447 = vmatprep.subr.mxu0 0.0
    %448 = vmatpush1.msra.mxu0 %v373
    %449 = vmatprep.subr.mxu0 0.0
    %450 = vmatpush1.msra.mxu0 %v374
    %451 = vmatprep.subr.mxu0 0.0
    %452 = vmatpush1.msra.mxu0 %v375
    %453 = vmatprep.subr.mxu0 0.0
    %454 = vmatpush1.msra.mxu0 %v376
    %455 = vmatprep.subr.mxu0 0.0
    %456 = vmatpush1.msra.mxu0 %v377
    %457 = vmatprep.subr.mxu0 0.0
    %458 = vmatpush1.msra.mxu0 %v378
    %459 = vmatprep.subr.mxu0 0.0
    %460 = vmatpush1.msra.mxu0 %v379
    %461 = vmatprep.subr.mxu0 0.0
    %462 = vmatpush1.msra.mxu0 %v380
    %463 = vmatprep.subr.mxu0 0.0
    %464 = vmatpush1.msra.mxu0 %v381
    %465 = vmatprep.subr.mxu0 0.0
    %466 = vmatpush1.msra.mxu0 %v382
    %467 = vmatprep.subr.mxu0 0.0
    %468 = vmatpush1.msra.mxu0 %v383
    %469 = vmatprep.subr.mxu0 0.0
    %470 = vmatpush1.msra.mxu0 %v384
    %471 = vmatprep.subr.mxu0 0.0
    %472 = vmatpush1.msra.mxu0 %v385
    %473 = vmatprep.subr.mxu0 0.0
    %474 = vmatpush1.msra.mxu0 %v386
    %475 = vmatprep.subr.mxu0 0.0
    %476 = vmatpush1.msra.mxu0 %v387
    %477 = vmatprep.subr.mxu0 0.0
    %478 = vmatpush1.msra.mxu0 %v388
    %479 = vmatprep.subr.mxu0 0.0
    %480 = vmatpush1.msra.mxu0 %v389
    %481 = vmatprep.mubr.f32.mxu0 %v354
    %482 = vmatmul.mubr.f32.gmra.mrb[0].mxu0 %v353
    %v483 = vpop.f32.mrb[0].mxu0
    %v484 = vadd.f32 %v413, %v483
    %v485 = vpop.f32.mrb[0].mxu0
    %486 = vdwg.mxu0
    %487 = vmatprep.subr.mxu0 0.0
    %488 = vmatpush1.msra.mxu0 %v390
    %489 = vmatprep.subr.mxu0 0.0
    %490 = vmatpush1.msra.mxu0 %v391
    %491 = vmatprep.subr.mxu0 0.0
    %492 = vmatpush1.msra.mxu0 %v392
    %493 = vmatprep.subr.mxu0 0.0
    %494 = vmatpush1.msra.mxu0 %v393
    %495 = vmatprep.subr.mxu0 0.0
    %496 = vmatpush1.msra.mxu0 %v394
    %497 = vmatprep.subr.mxu0 0.0
    %498 = vmatpush1.msra.mxu0 %v395
    %499 = vmatprep.subr.mxu0 0.0
    %500 = vmatpush1.msra.mxu0 %v396
    %501 = vmatprep.subr.mxu0 0.0
    %502 = vmatpush1.msra.mxu0 %v397
    %503 = vmatprep.subr.mxu0 0.0
    %504 = vmatpush1.msra.mxu0 %v398
    %505 = vmatprep.subr.mxu0 0.0
    %506 = vmatpush1.msra.mxu0 %v399
    %507 = vmatprep.subr.mxu0 0.0
    %508 = vmatpush1.msra.mxu0 %v400
    %509 = vmatprep.subr.mxu0 0.0
    %510 = vmatpush1.msra.mxu0 %v401
    %511 = vmatprep.subr.mxu0 0.0
    %512 = vmatpush1.msra.mxu0 %v402
    %513 = vmatprep.subr.mxu0 0.0
    %514 = vmatpush1.msra.mxu0 %v403
    %515 = vmatprep.subr.mxu0 0.0
    %516 = vmatpush1.msra.mxu0 %v404
    %517 = vmatprep.subr.mxu0 0.0
    %518 = vmatpush1.msra.mxu0 %v405
    %519 = vmatprep.subr.mxu0 0.0
    %520 = vmatpush1.msra.mxu0 %v406
    %521 = vmatprep.subr.mxu0 0.0
    %522 = vmatpush1.msra.mxu0 %v407
    %523 = vmatprep.subr.mxu0 0.0
    %524 = vmatpush1.msra.mxu0 %v408
    %525 = vmatprep.subr.mxu0 0.0
    %526 = vmatpush1.msra.mxu0 %v409
    %527 = vmatprep.subr.mxu0 0.0
    %528 = vmatpush1.msra.mxu0 0.0
    %529 = vmatprep.subr.mxu0 0.0
    %530 = vmatpush1.msra.mxu0 0.0
    %531 = vmatprep.subr.mxu0 0.0
    %532 = vmatpush1.msra.mxu0 0.0
    %533 = vmatprep.subr.mxu0 0.0
    %534 = vmatpush1.msra.mxu0 0.0
    %535 = vmatprep.subr.mxu0 0.0
    %536 = vmatpush1.msra.mxu0 0.0
    %537 = vmatprep.subr.mxu0 0.0
    %538 = vmatpush1.msra.mxu0 0.0
    %539 = vmatprep.subr.mxu0 0.0
    %540 = vmatpush1.msra.mxu0 0.0
    %541 = vmatprep.subr.mxu0 0.0
    %542 = vmatpush1.msra.mxu0 0.0
    %543 = vmatprep.subr.mxu0 0.0
    %544 = vmatpush1.msra.mxu0 0.0
    %545 = vmatprep.subr.mxu0 0.0
    %546 = vmatpush1.msra.mxu0 0.0
    %547 = vmatprep.subr.mxu0 0.0
    %548 = vmatpush1.msra.mxu0 0.0
    %549 = vmatprep.subr.mxu0 0.0
    %550 = vmatpush1.msra.mxu0 0.0
    %551 = vmatprep.mubr.f32.mxu0 %v415
    %552 = vmatmul.mubr.f32.gmra.mrb[0].mxu0 %v355
    %v553 = vpop.f32.mrb[0].mxu0
    %v554 = vadd.f32 %v484, %v553
    %v555 = vpop.f32.mrb[0].mxu0
    %556 = vdwg.mxu0
    %v557 = vmax.f32 %v554, 0.0
    %v558 = vld [vmem:[%s3 + $0x1] sm:$0x1]
    %v559 = vld [vmem:[#allocation5] sm:$0xff]
    %v560 = vld [vmem:[#allocation5 + $0x8] sm:$0xff]
    %v561 = vld [vmem:[#allocation5 + $0x10] sm:$0xff]
    %v562 = vld [vmem:[#allocation5 + $0x18] sm:$0xff]
    %v563 = vld [vmem:[#allocation5 + $0x20] sm:$0xff]
    %v564 = vld [vmem:[#allocation5 + $0x28] sm:$0xff]
    %v565 = vld [vmem:[#allocation5 + $0x30] sm:$0xff]
    %v566 = vld [vmem:[#allocation5 + $0x38] sm:$0xff]
    %v567 = vld [vmem:[#allocation5 + $0x40] sm:$0xff]
    %v568 = vld [vmem:[#allocation5 + $0x48] sm:$0xff]
    %v569 = vld [vmem:[#allocation5 + $0x50] sm:$0xff]
    %v570 = vld [vmem:[#allocation5 + $0x58] sm:$0xff]
    %v571 = vld [vmem:[#allocation5 + $0x60] sm:$0xff]
    %v572 = vld [vmem:[#allocation5 + $0x68] sm:$0xff]
    %v573 = vld [vmem:[#allocation5 + $0x70] sm:$0xff]
    %v574 = vld [vmem:[#allocation5 + $0x78] sm:$0xff]
    %v575 = vlaneseq
    %v576 = vshrl.u32 %v575, 7
    %v577 = vsub.s32 0, %v576
    %v578 = vrot.slane %v558, %v577
    %579 = vmatprep.subr.mxu0 0.0
    %580 = vmatpush1.msra.mxu0 %v559
    %581 = vmatprep.subr.mxu0 0.0
    %582 = vmatpush1.msra.mxu0 %v560
    %583 = vmatprep.subr.mxu0 0.0
    %584 = vmatpush1.msra.mxu0 %v561
    %585 = vmatprep.subr.mxu0 0.0
    %586 = vmatpush1.msra.mxu0 %v562
    %587 = vmatprep.subr.mxu0 0.0
    %588 = vmatpush1.msra.mxu0 %v563
    %589 = vmatprep.subr.mxu0 0.0
    %590 = vmatpush1.msra.mxu0 %v564
    %591 = vmatprep.subr.mxu0 0.0
    %592 = vmatpush1.msra.mxu0 %v565
    %593 = vmatprep.subr.mxu0 0.0
    %594 = vmatpush1.msra.mxu0 %v566
    %595 = vmatprep.subr.mxu0 0.0
    %596 = vmatpush1.msra.mxu0 %v567
    %597 = vmatprep.subr.mxu0 0.0
    %598 = vmatpush1.msra.mxu0 %v568
    %599 = vmatprep.subr.mxu0 0.0
    %600 = vmatpush1.msra.mxu0 %v569
    %601 = vmatprep.subr.mxu0 0.0
    %602 = vmatpush1.msra.mxu0 %v570
    %603 = vmatprep.subr.mxu0 0.0
    %604 = vmatpush1.msra.mxu0 %v571
    %605 = vmatprep.subr.mxu0 0.0
    %606 = vmatpush1.msra.mxu0 %v572
    %607 = vmatprep.subr.mxu0 0.0
    %608 = vmatpush1.msra.mxu0 %v573
    %609 = vmatprep.subr.mxu0 0.0
    %610 = vmatpush1.msra.mxu0 %v574
    %611 = vmatprep.subr.mxu0 0.0
    %612 = vmatpush1.msra.mxu0 0.0
    %613 = vmatprep.subr.mxu0 0.0
    %614 = vmatpush1.msra.mxu0 0.0
    %615 = vmatprep.subr.mxu0 0.0
    %616 = vmatpush1.msra.mxu0 0.0
    %617 = vmatprep.subr.mxu0 0.0
    %618 = vmatpush1.msra.mxu0 0.0
    %619 = vmatprep.subr.mxu0 0.0
    %620 = vmatpush1.msra.mxu0 0.0
    %621 = vmatprep.subr.mxu0 0.0
    %622 = vmatpush1.msra.mxu0 0.0
    %623 = vmatprep.subr.mxu0 0.0
    %624 = vmatpush1.msra.mxu0 0.0
    %625 = vmatprep.subr.mxu0 0.0
    %626 = vmatpush1.msra.mxu0 0.0
    %627 = vmatprep.subr.mxu0 0.0
    %628 = vmatpush1.msra.mxu0 0.0
    %629 = vmatprep.subr.mxu0 0.0
    %630 = vmatpush1.msra.mxu0 0.0
    %631 = vmatprep.subr.mxu0 0.0
    %632 = vmatpush1.msra.mxu0 0.0
    %633 = vmatprep.subr.mxu0 0.0
    %634 = vmatpush1.msra.mxu0 0.0
    %635 = vmatprep.subr.mxu0 0.0
    %636 = vmatpush1.msra.mxu0 0.0
    %637 = vmatprep.subr.mxu0 0.0
    %638 = vmatpush1.msra.mxu0 0.0
    %639 = vmatprep.subr.mxu0 0.0
    %640 = vmatpush1.msra.mxu0 0.0
    %641 = vmatprep.subr.mxu0 0.0
    %642 = vmatpush1.msra.mxu0 0.0
    %643 = vmatprep.mubr.f32.mxu0 0.0
    %644 = vmatmul.mubr.f32.gmra.mrb[0].mxu0 %v557
    %v645 = vpop.f32.mrb[0].mxu0
    %v646 = vadd.f32 %v578, %v645
    %v647 = vpop.f32.mrb[0].mxu0
    %648 = vdwg.mxu0
    %649 = vst [vmem:[#allocation7] sm:$0x3] %v646
    // Predicated region
    $region26: #{tpu_custom_call.1} parent=1 // pred_check
      _
    $region27: #{tpu_custom_call.1} parent=1 // pred_check_branch
      %651 = sbr.rel (0) target = $region29
    $region28: #{tpu_custom_call.1} parent=1 // pred_region
      %s653 = ssub.s32 32, 32
      %654 = vsyncadd [#allocation4], %s653
      %s656 = sshll.u32 [#allocation7], 4
      %s657 = int_to_ptr.vmem [resolvable:$true] %s656
      %659 = dma.vmem_to_hbm [thread:$0]  %s657, 32, %s4, [#allocation4]
    $region29: #{tpu_custom_call.1} parent=1 // pred_fallthru
      _
    // Predicated region
    $region30: #{tpu_custom_call.1} parent=1 // pred_check
      _
    $region31: #{tpu_custom_call.1} parent=1 // pred_check_branch
      %661 = sbr.rel (0) target = $region33
    $region32: #{tpu_custom_call.1} parent=1 // pred_region
      %662 = dma.done [#allocation4], 32
    $region33: #{tpu_custom_call.1} parent=1 // pred_fallthru
      _
    %663 = vsyncpa [#allocation3], 1
    %664 = vsyncpa [#allocation6], 1
    %665 = vsyncpa [#allocation4], 1

</llo_original>
